<compile_context>
chip_gen: v7x
topology: tpu7x:2x2x1
jax: 0.10.0
libtpu: 0.0.40
codegen_flags: <defaults>
</compile_context>

<pallas_src>
import functools
import math

import jax
import jax.numpy as jnp
import numpy as np
from jax.experimental import pallas as pl
from jax.experimental.pallas import tpu as pltpu

# Finite "minus infinity" used by the online-softmax (flash) path: keeps the
# running rescale NaN-free while still flushing masked weights to exactly 0.
_FLASH_MASK_FILL = -1e30


def _round_up(x, m):
    return ((x + m - 1) // m) * m


def _vmem_budget():
    try:
        phys = int(pltpu.get_tpu_info().vmem_capacity_bytes)
    except Exception:
        phys = 64 * 1024 * 1024          # conservative (v7x) fallback
    return phys, int(0.5 * phys)         # headroom for compiler scratch


def _cast_qk(q_ref, k_ref, scale, compute_dtype):
    """Load Q/K, applying the 1/sqrt(dim) scale directly in compute_dtype."""
    if compute_dtype is not None:
        q = q_ref[...].astype(compute_dtype) * jnp.asarray(scale, compute_dtype)
        k = k_ref[...].astype(compute_dtype)
    else:
        q = q_ref[...] * scale
        k = k_ref[...]
    return q, k


# --------------------------------------------------------------------------
# Kernel 1: full-row softmax (returns context AND the attention matrix).
#   Blocks: q (BB,TQ,D), k/v (BB,Lk,D) resident over the q axis,
#           ctx (BB,TQ,D), attn (BB,TQ,Lk), optional mask (BB,TQ,Lk) int8.
# --------------------------------------------------------------------------
def _sdpa_slab_kernel(*refs, has_mask, scale, compute_dtype, approx):
    q_ref, k_ref, v_ref = refs[:3]
    if has_mask:
        mask_ref, ctx_ref, attn_ref = refs[3:6]
    else:
        mask_ref = None
        ctx_ref, attn_ref = refs[3:5]

    q, k = _cast_qk(q_ref, k_ref, scale, compute_dtype)
    v = v_ref[...]

    # Q @ K^T as a batched contraction over d in K's natural [k, d] layout
    # (no transposed K tile is materialized).
    score = jnp.einsum("bqd,bkd->bqk", q, k, preferred_element_type=jnp.float32)

    if mask_ref is not None:
        # torch masked_fill_(mask, -inf): nonzero/True entries masked out.
        score = jnp.where(mask_ref[...] != 0, -jnp.inf, score)

    # Numerically-stable softmax over the key axis.  The reciprocal runs on
    # the EUP slot when approx=True (essentially free in the VLIW bundle).
    m = jnp.max(score, axis=-1, keepdims=True)
    e = jnp.exp(score - m)
    denom = jnp.sum(e, axis=-1, keepdims=True)
    attn = e * pl.reciprocal(denom, approx=approx)

    attn_ref[...] = attn.astype(attn_ref.dtype)

    p_dtype = compute_dtype if compute_dtype is not None else v.dtype
    ctx = jnp.einsum("bqk,bkd->bqd", attn.astype(p_dtype), v.astype(p_dtype),
                     preferred_element_type=jnp.float32)
    ctx_ref[...] = ctx.astype(ctx_ref.dtype)


# --------------------------------------------------------------------------
# Kernel 2: flash-style online softmax (context only, Lk tiled).
#   grid = (B//BB, Lq/TQ, Lk/TK); kv axis is the innermost "arbitrary" axis.
# --------------------------------------------------------------------------
def _sdpa_flash_kernel(*refs, has_mask, scale, compute_dtype, approx):
    q_ref, k_ref, v_ref = refs[:3]
    if has_mask:
        mask_ref, ctx_ref, m_sc, l_sc, acc_sc = refs[3:8]
    else:
        mask_ref = None
        ctx_ref, m_sc, l_sc, acc_sc = refs[3:7]

    kv = pl.program_id(2)

    @pl.when(kv == 0)
    def _():
        m_sc[...] = jnp.full_like(m_sc, -jnp.inf)
        l_sc[...] = jnp.zeros_like(l_sc)
        acc_sc[...] = jnp.zeros_like(acc_sc)

    q, k = _cast_qk(q_ref, k_ref, scale, compute_dtype)
    v = v_ref[...]

    s = jnp.einsum("bqd,bkd->bqk", q, k, preferred_element_type=jnp.float32)
    if mask_ref is not None:
        s = jnp.where(mask_ref[...] != 0, _FLASH_MASK_FILL, s)

    m_prev = m_sc[...]
    m_new = jnp.maximum(m_prev, jnp.max(s, axis=-1, keepdims=True))
    alpha = jnp.exp(m_prev - m_new)
    p = jnp.exp(s - m_new)

    l_sc[...] = alpha * l_sc[...] + jnp.sum(p, axis=-1, keepdims=True)
    p_dtype = compute_dtype if compute_dtype is not None else v.dtype
    acc_sc[...] = alpha * acc_sc[...] + jnp.einsum(
        "bqk,bkd->bqd", p.astype(p_dtype), v.astype(p_dtype),
        preferred_element_type=jnp.float32)
    m_sc[...] = m_new

    @pl.when(kv == pl.num_programs(2) - 1)
    def _():
        ctx_ref[...] = (acc_sc[...] *
                        pl.reciprocal(l_sc[...], approx=approx)).astype(ctx_ref.dtype)


# --------------------------------------------------------------------------
# Wrappers
# --------------------------------------------------------------------------
def _flash_attention(query, key, value, mask_in, scale, *, compute_dtype,
                     approx, kv_block, row_align, budget, phys_vmem):
    """Context-only path; attention matrix is never materialized in HBM."""
    B, Lq, D = query.shape
    _, Lk, _ = key.shape

    q_isz = jnp.dtype(query.dtype).itemsize
    kv_isz = jnp.dtype(key.dtype).itemsize + jnp.dtype(value.dtype).itemsize
    mask_isz = 1 if mask_in is not None else 0

    # Key-axis tile: prefer a lane-dense multiple of 128 that divides Lk.
    if kv_block is not None and Lk % kv_block == 0:
        TK = kv_block
    else:
        TK = Lk
        for cand in (512, 256, 128):
            if Lk % cand == 0:
                TK = cand
                break
        # TODO(synk): if Lk is not a multiple of 128, pad K/V and add an
        # in-kernel key-length mask instead of this TK == Lk fallback.

    def step_bytes(bb, tq):
        b = 2 * bb * tq * D * q_isz            # Q tile (double buffered)
        b += 2 * bb * TK * D * kv_isz          # K,V tiles
        b += 2 * bb * tq * D * q_isz           # ctx tile
        b += 2 * bb * tq * TK * mask_isz       # int8 mask tile
        b += bb * tq * (2 + D) * 4             # m/l/acc scratch (single buf)
        b += 2 * bb * tq * TK * 4              # live f32 s/p slabs
        return b

    if step_bytes(1, Lq) <= budget:
        TQ, BB = Lq, 1
        target = min(budget, 32 * 1024 * 1024)
        for cand in range(B, 1, -1):
            if B % cand == 0 and step_bytes(cand, Lq) <= target:
                BB = cand
                break
    else:
        BB = 1
        tq = max(row_align, (Lq // row_align) * row_align)
        while tq > row_align and step_bytes(1, tq) > budget:
            tq = max(row_align, (tq // 2 // row_align) * row_align)
        TQ = 0
        for cand in range(tq, row_align - 1, -row_align):
            if Lq % cand == 0:        # avoid wrapper-side pad / output slice
                TQ = cand
                break
        if TQ == 0:
            TQ = tq

    Lq_pad = Lq if Lq % TQ == 0 else _round_up(Lq, TQ)
    pad_q = Lq_pad - Lq
    q_in = jnp.pad(query, ((0, 0), (0, pad_q), (0, 0))) if pad_q else query
    if mask_in is not None and pad_q:
        mask_in = jnp.pad(mask_in, ((0, 0), (0, pad_q), (0, 0)))

    grid = (B // BB, Lq_pad // TQ, Lk // TK)

    in_specs = [
        pl.BlockSpec((BB, TQ, D), lambda b, i, k: (b, i, 0)),   # Q
        pl.BlockSpec((BB, TK, D), lambda b, i, k: (b, k, 0)),   # K
        pl.BlockSpec((BB, TK, D), lambda b, i, k: (b, k, 0)),   # V
    ]
    inputs = [q_in, key, value]
    if mask_in is not None:
        in_specs.append(pl.BlockSpec((BB, TQ, TK), lambda b, i, k: (b, i, k)))
        inputs.append(mask_in)

    kernel = functools.partial(_sdpa_flash_kernel,
                               has_mask=mask_in is not None, scale=scale,
                               compute_dtype=compute_dtype, approx=approx)

    vmem_limit = int(min(phys_vmem,
                         max(32 * 1024 * 1024, int(step_bytes(BB, TQ) * 1.4))))

    ctx = pl.pallas_call(
        kernel,
        out_shape=jax.ShapeDtypeStruct((B, Lq_pad, D), query.dtype),
        grid_spec=pltpu.PrefetchScalarGridSpec(
            num_scalar_prefetch=0,
            grid=grid,
            in_specs=in_specs,
            out_specs=pl.BlockSpec((BB, TQ, D), lambda b, i, k: (b, i, 0)),
            scratch_shapes=[
                pltpu.VMEM((BB, TQ, 1), jnp.float32),   # running max
                pltpu.VMEM((BB, TQ, 1), jnp.float32),   # running sum
                pltpu.VMEM((BB, TQ, D), jnp.float32),   # output accumulator
            ],
        ),
        compiler_params=pltpu.CompilerParams(
            dimension_semantics=("parallel", "arbitrary", "arbitrary"),
            vmem_limit_bytes=vmem_limit,
        ),
    )(*inputs)

    if pad_q:
        ctx = ctx[:, :Lq, :]
    return ctx


def scaled_dot_product_attention(query, key, value, mask=None, dim=None, *,
                                 return_attn=True,
                                 attn_dtype=jnp.float32,
                                 compute_dtype=jnp.bfloat16,
                                 approx_softmax=True,
                                 kv_block=None):
    """query (B,Lq,D), key (B,Lk,D), value (B,Lk,D) -> (context, attn).

    mask: optional tensor reshapeable to (B, Lq, Lk); nonzero/True entries are
      filled with -inf before the softmax (torch masked_fill_ semantics).
    return_attn: when False only the context is returned, via a flash-style
      online-softmax kernel (biggest bandwidth lever: the (B,Lq,Lk) write is
      dropped entirely).
    attn_dtype: dtype of the returned attention matrix (f32 matches torch;
      bf16 halves its HBM write).
    compute_dtype: MXU operand dtype (bf16 default; accumulation stays f32).
      Pass None for full input-dtype operands.
    approx_softmax: use the EUP approximate reciprocal (set False for
      bit-closer parity with the PyTorch module).
    """
    B, Lq, D = query.shape
    _, Lk, _ = key.shape
    if dim is None:
        dim = D
    scale = float(1.0 / math.sqrt(dim))

    phys_vmem, budget = _vmem_budget()

    # Sublane alignment for the q axis: bf16 packs 2 rows/sublane, int8 4.
    cds = jnp.dtype(compute_dtype).itemsize if compute_dtype is not None else 4
    row_align = {4: 8, 2: 16, 1: 32}.get(cds, 8)

    mask_in = None
    if mask is not None:
        # int8 mask: 4x less HBM traffic + VMEM than int32.
        mask_in = jnp.reshape(mask, (B, Lq, Lk)).astype(jnp.int8)

    if not return_attn:
        return _flash_attention(query, key, value, mask_in, scale,
                                compute_dtype=compute_dtype,
                                approx=approx_softmax, kv_block=kv_block,
                                row_align=row_align, budget=budget,
                                phys_vmem=phys_vmem)

    # ---------------- full-attention (slab) path ----------------------------
    q_isz = jnp.dtype(query.dtype).itemsize
    kv_isz = jnp.dtype(key.dtype).itemsize + jnp.dtype(value.dtype).itemsize
    attn_isz = jnp.dtype(attn_dtype).itemsize
    mask_isz = 1 if mask_in is not None else 0

    def step_bytes(bb, tq):
        b = 2 * bb * tq * D * q_isz              # Q tile (double buffered)
        b += 2 * bb * Lk * D * kv_isz            # K,V resident blocks
        b += 2 * bb * tq * D * q_isz             # ctx output tile
        b += 2 * bb * tq * Lk * (attn_isz + mask_isz)
        b += 2 * bb * tq * Lk * 4                # live f32 score/exp slabs
        return b

    if step_bytes(1, Lq) <= budget:
        TQ, BB = Lq, 1
        # Group batch elements per grid step to amortize the ~0.35us step cost
        # when per-batch work is tiny.
        target = min(budget, 32 * 1024 * 1024)
        for cand in range(B, 1, -1):
            if B % cand == 0 and step_bytes(cand, Lq) <= target:
                BB = cand
                break
    else:
        BB = 1
        tq = max(row_align, (Lq // row_align) * row_align)
        while tq > row_align and step_bytes(1, tq) > budget:
            tq = max(row_align, (tq // 2 // row_align) * row_align)
        # Prefer a TQ that divides Lq: avoids the wrapper-side jnp.pad of
        # Q/mask and the post-call output slices (un-hidden HBM-sized copies).
        TQ = 0
        for cand in range(tq, row_align - 1, -row_align):
            if Lq % cand == 0:
                TQ = cand
                break
        if TQ == 0:
            TQ = tq
        # TODO(synk): if even TQ=row_align with the full Lk row exceeds the
        # budget (multi-thousand-token Lk) while attn must be returned, tile
        # Lk too and write attn per-(q,k) tile.

    Lq_pad = Lq if Lq % TQ == 0 else _round_up(Lq, TQ)
    pad_q = Lq_pad - Lq
    q_in = jnp.pad(query, ((0, 0), (0, pad_q), (0, 0))) if pad_q else query
    if mask_in is not None and pad_q:
        mask_in = jnp.pad(mask_in, ((0, 0), (0, pad_q), (0, 0)))

    grid = (B // BB, Lq_pad // TQ)

    in_specs = [
        pl.BlockSpec((BB, TQ, D), lambda b, i: (b, i, 0)),   # Q tile
        # K/V block index is constant along the q axis -> stays resident.
        pl.BlockSpec((BB, Lk, D), lambda b, i: (b, 0, 0)),
        pl.BlockSpec((BB, Lk, D), lambda b, i: (b, 0, 0)),
    ]
    inputs = [q_in, key, value]
    if mask_in is not None:
        in_specs.append(pl.BlockSpec((BB, TQ, Lk), lambda b, i: (b, i, 0)))
        inputs.append(mask_in)

    out_shapes = (
        jax.ShapeDtypeStruct((B, Lq_pad, D), query.dtype),     # context
        jax.ShapeDtypeStruct((B, Lq_pad, Lk), attn_dtype),     # attn
    )
    out_specs = [
        pl.BlockSpec((BB, TQ, D), lambda b, i: (b, i, 0)),
        pl.BlockSpec((BB, TQ, Lk), lambda b, i: (b, i, 0)),
    ]

    kernel = functools.partial(_sdpa_slab_kernel,
                               has_mask=mask_in is not None, scale=scale,
                               compute_dtype=compute_dtype,
                               approx=approx_softmax)

    vmem_limit = int(min(phys_vmem,
                         max(32 * 1024 * 1024, int(step_bytes(BB, TQ) * 1.4))))

    ctx, attn = pl.pallas_call(
        kernel,
        out_shape=out_shapes,
        grid_spec=pltpu.PrefetchScalarGridSpec(
            num_scalar_prefetch=0,
            grid=grid,
            in_specs=in_specs,
            out_specs=out_specs,
        ),
        compiler_params=pltpu.CompilerParams(
            # Only the batch axis is "parallel": on v7x a megacore split on
            # the q axis would duplicate the resident K/V DMA on both cores.
            dimension_semantics=("parallel", "arbitrary"),
            vmem_limit_bytes=vmem_limit,
        ),
    )(*inputs)

    if pad_q:
        ctx = ctx[:, :Lq, :]
        attn = attn[:, :Lq, :]
    return ctx, attn


# --------------------------------------------------------------------------
# Reference + self-test
# --------------------------------------------------------------------------
def _reference(query, key, value, dim, mask=None):
    score = jnp.einsum("bqd,bkd->bqk", query, key) / math.sqrt(dim)
    if mask is not None:
        score = jnp.where(mask, -jnp.inf, score)
    attn = jax.nn.softmax(score, axis=-1)
    context = jnp.einsum("bqk,bkd->bqd", attn, value)
    return context, attn


if __name__ == "__main__":
    B, Lq, Lk, D = 2, 8, 8, 32   # batch, q_len, k_len, d_model

    root = jax.random.PRNGKey(0)
    kq, kk, kv, km = jax.random.split(root, 4)
    query = jax.random.normal(kq, (B, Lq, D), dtype=jnp.float32)
    key_t = jax.random.normal(kk, (B, Lk, D), dtype=jnp.float32)
    value = jax.random.normal(kv, (B, Lk, D), dtype=jnp.float32)
    ctx_ref, attn_ref = _reference(query, key_t, value, D)

    # 1) exact-ish settings (f32 MXU operands, exact reciprocal).
    ctx, attn = scaled_dot_product_attention(query, key_t, value, dim=D,
                                             compute_dtype=None,
                                             approx_softmax=False)
    jax.block_until_ready((ctx, attn))
    np.testing.assert_allclose(np.asarray(ctx), np.asarray(ctx_ref),
                               rtol=2e-2, atol=2e-2)
    np.testing.assert_allclose(np.asarray(attn), np.asarray(attn_ref),
                               rtol=2e-2, atol=2e-2)

    # 2) default fast settings (bf16 MXU operands, EUP reciprocal).
    ctx, attn = scaled_dot_product_attention(query, key_t, value, dim=D)
    jax.block_until_ready((ctx, attn))
    np.testing.assert_allclose(np.asarray(ctx), np.asarray(ctx_ref),
                               rtol=5e-2, atol=5e-2)
    np.testing.assert_allclose(np.asarray(attn), np.asarray(attn_ref),
                               rtol=5e-2, atol=5e-2)

    # 3) masked path (True = masked out with -inf before softmax).
    mask = jax.random.bernoulli(km, 0.3, (B, Lq, Lk))
    mask = mask.at[:, :, 0].set(False)    # keep >=1 valid key per row
    ctx_m, attn_m = scaled_dot_product_attention(query, key_t, value,
                                                 mask=mask, dim=D)
    jax.block_until_ready((ctx_m, attn_m))
    ctx_mr, attn_mr = _reference(query, key_t, value, D, mask)
    np.testing.assert_allclose(np.asarray(ctx_m), np.asarray(ctx_mr),
                               rtol=5e-2, atol=5e-2)
    np.testing.assert_allclose(np.asarray(attn_m), np.asarray(attn_mr),
                               rtol=5e-2, atol=5e-2)

    # 4) context-only flash path (attention matrix never written to HBM),
    #    exercised with a multi-step key loop and a mask.
    B2, Lq2, Lk2, D2 = 2, 128, 256, 64
    k2 = jax.random.split(jax.random.PRNGKey(1), 4)
    q2 = jax.random.normal(k2[0], (B2, Lq2, D2), dtype=jnp.float32)
    kk2 = jax.random.normal(k2[1], (B2, Lk2, D2), dtype=jnp.float32)
    v2 = jax.random.normal(k2[2], (B2, Lk2, D2), dtype=jnp.float32)
    m2 = jax.random.bernoulli(k2[3], 0.3, (B2, Lq2, Lk2))
    m2 = m2.at[:, :, 0].set(False)
    ctx_f = scaled_dot_product_attention(q2, kk2, v2, mask=m2, dim=D2,
                                         return_attn=False, kv_block=128)
    jax.block_until_ready(ctx_f)
    ctx_fr, _ = _reference(q2, kk2, v2, D2, m2)
    np.testing.assert_allclose(np.asarray(ctx_f), np.asarray(ctx_fr),
                               rtol=5e-2, atol=5e-2)

    print("KERNEL_OK")
</pallas_src>

<mosaic_0001>
module attributes {stable_mosaic.version = 11 : i64} {
  func.func @_sdpa_slab_kernel(%arg0: i32, %arg1: i32, %arg2: memref<2x8x32xf32, #tpu.memory_space<vmem>>, %arg3: memref<2x8x32xf32, #tpu.memory_space<vmem>>, %arg4: memref<2x8x32xf32, #tpu.memory_space<vmem>>, %arg5: memref<2x8x32xf32, #tpu.memory_space<vmem>>, %arg6: memref<2x8x8xf32, #tpu.memory_space<vmem>>) attributes {dimension_semantics = [#tpu.dimension_semantics<parallel>, #tpu.dimension_semantics<arbitrary>], iteration_bounds = array<i64: 1, 1>, scalar_prefetch = 0 : i64, scratch_operands = 0 : i64, tpu.core_type = #tpu.core_type<tc>, window_params = [{transform_indices = @transform_0, window_bounds = array<i64: 2, 8, 32>}, {transform_indices = @transform_1, window_bounds = array<i64: 2, 8, 32>}, {transform_indices = @transform_2, window_bounds = array<i64: 2, 8, 32>}, {transform_indices = @transform_3, window_bounds = array<i64: 2, 8, 32>}, {transform_indices = @transform_4, window_bounds = array<i64: 2, 8, 8>}]} {
    %c0 = arith.constant 0 : index
    %c0_0 = arith.constant 0 : index
    %c0_1 = arith.constant 0 : index
    %0 = vector.load %arg2[%c0, %c0_0, %c0_1] : memref<2x8x32xf32, #tpu.memory_space<vmem>>, vector<2x8x32xf32>
    %cst = arith.constant 0.176776692 : f32
    %1 = vector.broadcast %cst : f32 to vector<2x8x32xf32>
    %2 = arith.mulf %0, %1 : vector<2x8x32xf32>
    %c0_2 = arith.constant 0 : index
    %c0_3 = arith.constant 0 : index
    %c0_4 = arith.constant 0 : index
    %3 = vector.load %arg3[%c0_2, %c0_3, %c0_4] : memref<2x8x32xf32, #tpu.memory_space<vmem>>, vector<2x8x32xf32>
    %c0_5 = arith.constant 0 : index
    %c0_6 = arith.constant 0 : index
    %c0_7 = arith.constant 0 : index
    %4 = vector.load %arg4[%c0_5, %c0_6, %c0_7] : memref<2x8x32xf32, #tpu.memory_space<vmem>>, vector<2x8x32xf32>
    "tpu.trace_start"() <{level = 10 : i32, message = "bqd,bkd->bqk"}> : () -> ()
    %cst_8 = arith.constant dense<0.000000e+00> : vector<2x8x8xf32>
    %5 = tpu.matmul %2, %3, %cst_8 {dimension_numbers = #tpu.dot_dimension_numbers<[2], [2], [1], [1], [0, 0, 0, 1, 1, 1], [0], [0]>} : vector<2x8x32xf32>, vector<2x8x32xf32>, vector<2x8x8xf32> -> vector<2x8x8xf32>
    "tpu.trace_stop"() : () -> ()
    %cst_9 = arith.constant dense<0xFF800000> : vector<2x8xf32>
    %6 = vector.multi_reduction <maximumf>, %5, %cst_9 [2] : vector<2x8x8xf32> to vector<2x8xf32>
    %7 = vector.shape_cast %6 : vector<2x8xf32> to vector<2x8x1xf32>
    %8 = vector.broadcast %7 : vector<2x8x1xf32> to vector<2x8x8xf32>
    %9 = arith.subf %5, %8 : vector<2x8x8xf32>
    %10 = math.exp %9 : vector<2x8x8xf32>
    %cst_10 = arith.constant dense<0.000000e+00> : vector<2x8xf32>
    %11 = vector.multi_reduction <add>, %10, %cst_10 [2] : vector<2x8x8xf32> to vector<2x8xf32>
    %12 = vector.shape_cast %11 : vector<2x8xf32> to vector<2x8x1xf32>
    %13 = tpu.reciprocal %12 : vector<2x8x1xf32> -> vector<2x8x1xf32>
    %14 = vector.broadcast %13 : vector<2x8x1xf32> to vector<2x8x8xf32>
    %15 = arith.mulf %10, %14 : vector<2x8x8xf32>
    %c0_11 = arith.constant 0 : index
    %c0_12 = arith.constant 0 : index
    %c0_13 = arith.constant 0 : index
    %16 = vector.load %arg6[%c0_11, %c0_12, %c0_13] : memref<2x8x8xf32, #tpu.memory_space<vmem>>, vector<2x8x8xf32>
    tpu.vector_store %arg6[%c0_11, %c0_12, %c0_13], %15 {strides = array<i32>} : memref<2x8x8xf32, #tpu.memory_space<vmem>>, vector<2x8x8xf32>,
    "tpu.trace_start"() <{level = 10 : i32, message = "bqk,bkd->bqd"}> : () -> ()
    %cst_14 = arith.constant dense<0.000000e+00> : vector<2x8x32xf32>
    %17 = tpu.matmul %15, %4, %cst_14 {dimension_numbers = #tpu.dot_dimension_numbers<[2], [1], [1], [2], [0, 0, 0, 1, 1, 2], [0], [0]>} : vector<2x8x8xf32>, vector<2x8x32xf32>, vector<2x8x32xf32> -> vector<2x8x32xf32>
    "tpu.trace_stop"() : () -> ()
    %c0_15 = arith.constant 0 : index
    %c0_16 = arith.constant 0 : index
    %c0_17 = arith.constant 0 : index
    %18 = vector.load %arg5[%c0_15, %c0_16, %c0_17] : memref<2x8x32xf32, #tpu.memory_space<vmem>>, vector<2x8x32xf32>
    tpu.vector_store %arg5[%c0_15, %c0_16, %c0_17], %17 {strides = array<i32>} : memref<2x8x32xf32, #tpu.memory_space<vmem>>, vector<2x8x32xf32>,
    return
  }
  func.func @transform_0(%arg0: i32, %arg1: i32) -> (i32, i32, i32) {
    %c0_i32 = arith.constant 0 : i32
    %c0_i32_0 = arith.constant 0 : i32
    return %arg0, %arg1, %c0_i32 : i32, i32, i32
  }
  func.func @transform_1(%arg0: i32, %arg1: i32) -> (i32, i32, i32) {
    %c0_i32 = arith.constant 0 : i32
    %c0_i32_0 = arith.constant 0 : i32
    %c0_i32_1 = arith.constant 0 : i32
    return %arg0, %c0_i32, %c0_i32_0 : i32, i32, i32
  }
  func.func @transform_2(%arg0: i32, %arg1: i32) -> (i32, i32, i32) {
    %c0_i32 = arith.constant 0 : i32
    %c0_i32_0 = arith.constant 0 : i32
    %c0_i32_1 = arith.constant 0 : i32
    return %arg0, %c0_i32, %c0_i32_0 : i32, i32, i32
  }
  func.func @transform_3(%arg0: i32, %arg1: i32) -> (i32, i32, i32) {
    %c0_i32 = arith.constant 0 : i32
    %c0_i32_0 = arith.constant 0 : i32
    return %arg0, %arg1, %c0_i32 : i32, i32, i32
  }
  func.func @transform_4(%arg0: i32, %arg1: i32) -> (i32, i32, i32) {
    %c0_i32 = arith.constant 0 : i32
    %c0_i32_0 = arith.constant 0 : i32
    return %arg0, %arg1, %c0_i32 : i32, i32, i32
  }
}

</mosaic_0001>

<llo_original>
// kernel: tpu_custom_call.1
$region0: #{tpu_custom_call.1}
  #allocation0 [shape = 'u32[]', space=smem, size = 0x4, offset = 0x4, fixed_abs, tag = 'smem constant byte address 0x4 - core index']
  #allocation1 [shape = 'u32[144,128]{1,0:T(1,128)}', space=vmem, size = 0x12000, scoped, tag = 'internal scratch']
  %s0 = inlined_call_operand.hbm [shape: f32[2,8,32], index: 0, kind: input, shape index: {}]
  %s1 = inlined_call_operand.hbm [shape: f32[2,8,32], index: 1, kind: input, shape index: {}]
  %s2 = inlined_call_operand.hbm [shape: f32[2,8,32], index: 2, kind: input, shape index: {}]
  %s3 = inlined_call_operand.hbm [shape: f32[2,8,32], index: 3, kind: output, shape index: {0}]
  %s4 = inlined_call_operand.hbm [shape: f32[2,8,8], index: 4, kind: output, shape index: {1}]
  %5 = xla_tuple %s3, %s4
  %s6 = sld [smem:[#allocation0]]
  $region42: #{tpu_custom_call.1} parent=0
    _
  %s8 = ssub.s32 1, %s6
  %s9 = scalar_select 0, %s8, %s6
  $region1: #{tpu_custom_call.1} parent=0
    #allocation2 [shape = 'u8[8192]{0}', space=vmem, size = 0x2000, scoped, tag = 'input window, operand 0, single buffered']
    #allocation3 [shape = 's32[1]{0}', space=sflag, size = 0x4, scoped, tag = 'scoped memory for tpu_custom_call.1']
    #allocation4 [shape = 's32[1]{0}', space=sflag, size = 0x4, scoped, tag = 'scoped memory for tpu_custom_call.1']
    #allocation5 [shape = 'u8[8192]{0}', space=vmem, size = 0x2000, scoped, tag = 'input window, operand 1, single buffered']
    #allocation6 [shape = 's32[1]{0}', space=sflag, size = 0x4, scoped, tag = 'scoped memory for tpu_custom_call.1']
    #allocation7 [shape = 'u8[8192]{0}', space=vmem, size = 0x2000, scoped, tag = 'input window, operand 2, single buffered']
    #allocation8 [shape = 'u8[8192]{0}', space=vmem, size = 0x2000, scoped, tag = 'output window, operand 0, single buffered']
    #allocation9 [shape = 'u8[8192]{0}', space=vmem, size = 0x2000, scoped, tag = 'output window, operand 1, single buffered']
    #allocation10 [shape = 's32[1]{0}', space=sflag, size = 0x4, scoped, tag = 'scoped memory for tpu_custom_call.1']
    %10 = vsyncpa [#allocation3], 0
    %11 = vsyncpa [#allocation6], 0
    %12 = vsyncpa [#allocation4], 0
    %13 = vsyncpa [#allocation10], 0
    // Predicated region
    $region2: #{tpu_custom_call.1} parent=1 // pred_check
      _
    $region3: #{tpu_custom_call.1} parent=1 // pred_check_branch
      %15 = sbr.rel (0) target = $region5
    $region4: #{tpu_custom_call.1} parent=1 // pred_region
      %s17 = ssub.s32 256, 256
      %18 = vsyncadd [#allocation3], %s17
      %s19 = sshll.u32 [#allocation2], 4
      %s20 = int_to_ptr.vmem [resolvable:$true] %s19
      %25 = dma.hbm_to_vmem [thread:$0]  %s0, 256, %s20, [#allocation3], 128, 128, 8
    $region5: #{tpu_custom_call.1} parent=1 // pred_fallthru
      _
    // Predicated region
    $region6: #{tpu_custom_call.1} parent=1 // pred_check
      _
    $region7: #{tpu_custom_call.1} parent=1 // pred_check_branch
      %27 = sbr.rel (0) target = $region9
    $region8: #{tpu_custom_call.1} parent=1 // pred_region
      %s29 = ssub.s32 256, 256
      %30 = vsyncadd [#allocation6], %s29
      %s31 = sshll.u32 [#allocation5], 4
      %s32 = int_to_ptr.vmem [resolvable:$true] %s31
      %37 = dma.hbm_to_vmem [thread:$0]  %s1, 256, %s32, [#allocation6], 128, 128, 8
    $region9: #{tpu_custom_call.1} parent=1 // pred_fallthru
      _
    // Predicated region
    $region10: #{tpu_custom_call.1} parent=1 // pred_check
      _
    $region11: #{tpu_custom_call.1} parent=1 // pred_check_branch
      %39 = sbr.rel (0) target = $region13
    $region12: #{tpu_custom_call.1} parent=1 // pred_region
      %s41 = ssub.s32 256, 256
      %42 = vsyncadd [#allocation6], %s41
      %s43 = sshll.u32 [#allocation7], 4
      %s44 = int_to_ptr.vmem [resolvable:$true] %s43
      %49 = dma.hbm_to_vmem [thread:$0]  %s2, 256, %s44, [#allocation6], 128, 128, 8
    $region13: #{tpu_custom_call.1} parent=1 // pred_fallthru
      _
    // Predicated region
    $region14: #{tpu_custom_call.1} parent=1 // pred_check
      _
    $region15: #{tpu_custom_call.1} parent=1 // pred_check_branch
      %51 = sbr.rel (0) target = $region17
    $region16: #{tpu_custom_call.1} parent=1 // pred_region
      %52 = dma.done [#allocation3], 256
    $region17: #{tpu_custom_call.1} parent=1 // pred_fallthru
      _
    // Predicated region
    $region18: #{tpu_custom_call.1} parent=1 // pred_check
      _
    $region19: #{tpu_custom_call.1} parent=1 // pred_check_branch
      %54 = sbr.rel (0) target = $region21
    $region20: #{tpu_custom_call.1} parent=1 // pred_region
      %55 = dma.done [#allocation6], 256
    $region21: #{tpu_custom_call.1} parent=1 // pred_fallthru
      _
    // Predicated region
    $region22: #{tpu_custom_call.1} parent=1 // pred_check
      _
    $region23: #{tpu_custom_call.1} parent=1 // pred_check_branch
      %57 = sbr.rel (0) target = $region25
    $region24: #{tpu_custom_call.1} parent=1 // pred_region
      %58 = dma.done [#allocation6], 256
    $region25: #{tpu_custom_call.1} parent=1 // pred_fallthru
      _
    %v59 = vld [vmem:[#allocation2] sm:$0xff]
    %v60 = vld [vmem:[#allocation2 + $0x8] sm:$0xff]
    %v61 = vmul.f32 %v59, 0.17677669
    %v62 = vmul.f32 %v60, 0.17677669
    %v63 = vld [vmem:[#allocation5] sm:$0xff]
    %v64 = vld [vmem:[#allocation5 + $0x8] sm:$0xff]
    %v65 = vld [vmem:[#allocation7] sm:$0xff]
    %v66 = vld [vmem:[#allocation7 + $0x8] sm:$0xff]
    %vm67 = vcmask 261120
    %v69 = vsel %vm67, %v61, 0
    %v72 = vsel %vm67, %v63, 0
    %74 = vmatprep.subr.mxu0 0.0
    %75 = vmatpush1.xpose.msra.mxu0 %v72
    %76 = vmatprep.subr.mxu0 0.0
    %77 = vmatpush1.xpose.msra.mxu0 0.0
    %78 = vmatprep.subr.mxu0 0.0
    %79 = vmatpush1.xpose.msra.mxu0 0.0
    %80 = vmatprep.subr.mxu0 0.0
    %81 = vmatpush1.xpose.msra.mxu0 0.0
    %82 = vmatprep.subr.mxu0 0.0
    %83 = vmatpush1.xpose.msra.mxu0 0.0
    %84 = vmatprep.subr.mxu0 0.0
    %85 = vmatpush1.xpose.msra.mxu0 0.0
    %86 = vmatprep.subr.mxu0 0.0
    %87 = vmatpush1.xpose.msra.mxu0 0.0
    %88 = vmatprep.subr.mxu0 0.0
    %89 = vmatpush1.xpose.msra.mxu0 0.0
    %90 = vmatprep.subr.mxu0 0.0
    %91 = vmatpush1.xpose.msra.mxu0 0.0
    %92 = vmatprep.subr.mxu0 0.0
    %93 = vmatpush1.xpose.msra.mxu0 0.0
    %94 = vmatprep.subr.mxu0 0.0
    %95 = vmatpush1.xpose.msra.mxu0 0.0
    %96 = vmatprep.subr.mxu0 0.0
    %97 = vmatpush1.xpose.msra.mxu0 0.0
    %98 = vmatprep.subr.mxu0 0.0
    %99 = vmatpush1.xpose.msra.mxu0 0.0
    %100 = vmatprep.subr.mxu0 0.0
    %101 = vmatpush1.xpose.msra.mxu0 0.0
    %102 = vmatprep.subr.mxu0 0.0
    %103 = vmatpush1.xpose.msra.mxu0 0.0
    %104 = vmatprep.subr.mxu0 0.0
    %105 = vmatpush1.xpose.msra.mxu0 0.0
    %106 = vmatprep.subr.mxu0 0.0
    %107 = vmatpush1.xpose.msra.mxu0 0.0
    %108 = vmatprep.subr.mxu0 0.0
    %109 = vmatpush1.xpose.msra.mxu0 0.0
    %110 = vmatprep.subr.mxu0 0.0
    %111 = vmatpush1.xpose.msra.mxu0 0.0
    %112 = vmatprep.subr.mxu0 0.0
    %113 = vmatpush1.xpose.msra.mxu0 0.0
    %114 = vmatprep.subr.mxu0 0.0
    %115 = vmatpush1.xpose.msra.mxu0 0.0
    %116 = vmatprep.subr.mxu0 0.0
    %117 = vmatpush1.xpose.msra.mxu0 0.0
    %118 = vmatprep.subr.mxu0 0.0
    %119 = vmatpush1.xpose.msra.mxu0 0.0
    %120 = vmatprep.subr.mxu0 0.0
    %121 = vmatpush1.xpose.msra.mxu0 0.0
    %122 = vmatprep.subr.mxu0 0.0
    %123 = vmatpush1.xpose.msra.mxu0 0.0
    %124 = vmatprep.subr.mxu0 0.0
    %125 = vmatpush1.xpose.msra.mxu0 0.0
    %126 = vmatprep.subr.mxu0 0.0
    %127 = vmatpush1.xpose.msra.mxu0 0.0
    %128 = vmatprep.subr.mxu0 0.0
    %129 = vmatpush1.xpose.msra.mxu0 0.0
    %130 = vmatprep.subr.mxu0 0.0
    %131 = vmatpush1.xpose.msra.mxu0 0.0
    %132 = vmatprep.subr.mxu0 0.0
    %133 = vmatpush1.xpose.msra.mxu0 0.0
    %134 = vmatprep.subr.mxu0 0.0
    %135 = vmatpush1.xpose.msra.mxu0 0.0
    %136 = vmatprep.subr.mxu0 0.0
    %137 = vmatpush1.xpose.msra.mxu0 0.0
    %138 = vmatprep.mubr.f32.mxu0 0.0
    %139 = vmatmul.mubr.f32.gmra.mrb[0].mxu0 %v69
    %v140 = vpop.f32.mrb[0].mxu0
    %v141 = vadd.f32 0.0, %v140
    %v142 = vpop.f32.mrb[0].mxu0
    %143 = vdwg.mxu0
    %v145 = vsel %vm67, %v62, 0
    %v148 = vsel %vm67, %v64, 0
    %150 = vmatprep.subr.mxu0 0.0
    %151 = vmatpush1.xpose.msra.mxu0 %v148
    %152 = vmatprep.subr.mxu0 0.0
    %153 = vmatpush1.xpose.msra.mxu0 0.0
    %154 = vmatprep.subr.mxu0 0.0
    %155 = vmatpush1.xpose.msra.mxu0 0.0
    %156 = vmatprep.subr.mxu0 0.0
    %157 = vmatpush1.xpose.msra.mxu0 0.0
    %158 = vmatprep.subr.mxu0 0.0
    %159 = vmatpush1.xpose.msra.mxu0 0.0
    %160 = vmatprep.subr.mxu0 0.0
    %161 = vmatpush1.xpose.msra.mxu0 0.0
    %162 = vmatprep.subr.mxu0 0.0
    %163 = vmatpush1.xpose.msra.mxu0 0.0
    %164 = vmatprep.subr.mxu0 0.0
    %165 = vmatpush1.xpose.msra.mxu0 0.0
    %166 = vmatprep.subr.mxu0 0.0
    %167 = vmatpush1.xpose.msra.mxu0 0.0
    %168 = vmatprep.subr.mxu0 0.0
    %169 = vmatpush1.xpose.msra.mxu0 0.0
    %170 = vmatprep.subr.mxu0 0.0
    %171 = vmatpush1.xpose.msra.mxu0 0.0
    %172 = vmatprep.subr.mxu0 0.0
    %173 = vmatpush1.xpose.msra.mxu0 0.0
    %174 = vmatprep.subr.mxu0 0.0
    %175 = vmatpush1.xpose.msra.mxu0 0.0
    %176 = vmatprep.subr.mxu0 0.0
    %177 = vmatpush1.xpose.msra.mxu0 0.0
    %178 = vmatprep.subr.mxu0 0.0
    %179 = vmatpush1.xpose.msra.mxu0 0.0
    %180 = vmatprep.subr.mxu0 0.0
    %181 = vmatpush1.xpose.msra.mxu0 0.0
    %182 = vmatprep.subr.mxu0 0.0
    %183 = vmatpush1.xpose.msra.mxu0 0.0
    %184 = vmatprep.subr.mxu0 0.0
    %185 = vmatpush1.xpose.msra.mxu0 0.0
    %186 = vmatprep.subr.mxu0 0.0
    %187 = vmatpush1.xpose.msra.mxu0 0.0
    %188 = vmatprep.subr.mxu0 0.0
    %189 = vmatpush1.xpose.msra.mxu0 0.0
    %190 = vmatprep.subr.mxu0 0.0
    %191 = vmatpush1.xpose.msra.mxu0 0.0
    %192 = vmatprep.subr.mxu0 0.0
    %193 = vmatpush1.xpose.msra.mxu0 0.0
    %194 = vmatprep.subr.mxu0 0.0
    %195 = vmatpush1.xpose.msra.mxu0 0.0
    %196 = vmatprep.subr.mxu0 0.0
    %197 = vmatpush1.xpose.msra.mxu0 0.0
    %198 = vmatprep.subr.mxu0 0.0
    %199 = vmatpush1.xpose.msra.mxu0 0.0
    %200 = vmatprep.subr.mxu0 0.0
    %201 = vmatpush1.xpose.msra.mxu0 0.0
    %202 = vmatprep.subr.mxu0 0.0
    %203 = vmatpush1.xpose.msra.mxu0 0.0
    %204 = vmatprep.subr.mxu0 0.0
    %205 = vmatpush1.xpose.msra.mxu0 0.0
    %206 = vmatprep.subr.mxu0 0.0
    %207 = vmatpush1.xpose.msra.mxu0 0.0
    %208 = vmatprep.subr.mxu0 0.0
    %209 = vmatpush1.xpose.msra.mxu0 0.0
    %210 = vmatprep.subr.mxu0 0.0
    %211 = vmatpush1.xpose.msra.mxu0 0.0
    %212 = vmatprep.subr.mxu0 0.0
    %213 = vmatpush1.xpose.msra.mxu0 0.0
    %214 = vmatprep.mubr.f32.mxu0 0.0
    %215 = vmatmul.mubr.f32.gmra.mrb[0].mxu0 %v145
    %v216 = vpop.f32.mrb[0].mxu0
    %v217 = vadd.f32 0.0, %v216
    %v218 = vpop.f32.mrb[0].mxu0
    %219 = vdwg.mxu0
    %vm220 = vcmask 64512
    %v221 = vsel %vm220, %v141, -inf
    %222 = vmax.xlane.f32.xlu0 %v221
    %v223 = vpop.xlane.xlu0 %222
    %v224 = vsel %vm220, %v217, -inf
    %225 = vmax.xlane.f32.xlu0 %v224
    %v226 = vpop.xlane.xlu0 %225
    %v227 = vsub.f32 %v141, %v223
    %v228 = vsub.f32 %v217, %v226
    %v229 = vmul.f32 %v227, 1.442695
    %v230 = vpow.pop %v229
    %v231 = vmul.f32 %v228, 1.442695
    %v232 = vpow.pop %v231
    %v233 = vsel %vm220, %v230, 0.0
    %234 = vadd.xlane.f32.xlu0 %v233
    %v235 = vpop.xlane.xlu0 %234
    %v236 = vsel %vm220, %v232, 0.0
    %237 = vadd.xlane.f32.xlu0 %v236
    %v238 = vpop.xlane.xlu0 %237
    %v239 = vrcp.pop %v235
    %v240 = vrcp.pop %v238
    %v241 = vmul.f32 %v230, %v239
    %v242 = vmul.f32 %v232, %v240
    %243 = vst.msk [vmem:[#allocation9] sm:$0xff] %vm220, %v241
    %244 = vst.msk [vmem:[#allocation9 + $0x8] sm:$0xff] %vm220, %v242
    %v246 = vsel %vm220, %v241, 0
    %248 = vmatprep.subr.mxu0 0.0
    %249 = vmatpush1.msra.mxu0 %v65
    %250 = vmatprep.subr.mxu0 0.0
    %251 = vmatpush1.msra.mxu0 0.0
    %252 = vmatprep.subr.mxu0 0.0
    %253 = vmatpush1.msra.mxu0 0.0
    %254 = vmatprep.subr.mxu0 0.0
    %255 = vmatpush1.msra.mxu0 0.0
    %256 = vmatprep.subr.mxu0 0.0
    %257 = vmatpush1.msra.mxu0 0.0
    %258 = vmatprep.subr.mxu0 0.0
    %259 = vmatpush1.msra.mxu0 0.0
    %260 = vmatprep.subr.mxu0 0.0
    %261 = vmatpush1.msra.mxu0 0.0
    %262 = vmatprep.subr.mxu0 0.0
    %263 = vmatpush1.msra.mxu0 0.0
    %264 = vmatprep.subr.mxu0 0.0
    %265 = vmatpush1.msra.mxu0 0.0
    %266 = vmatprep.subr.mxu0 0.0
    %267 = vmatpush1.msra.mxu0 0.0
    %268 = vmatprep.subr.mxu0 0.0
    %269 = vmatpush1.msra.mxu0 0.0
    %270 = vmatprep.subr.mxu0 0.0
    %271 = vmatpush1.msra.mxu0 0.0
    %272 = vmatprep.subr.mxu0 0.0
    %273 = vmatpush1.msra.mxu0 0.0
    %274 = vmatprep.subr.mxu0 0.0
    %275 = vmatpush1.msra.mxu0 0.0
    %276 = vmatprep.subr.mxu0 0.0
    %277 = vmatpush1.msra.mxu0 0.0
    %278 = vmatprep.subr.mxu0 0.0
    %279 = vmatpush1.msra.mxu0 0.0
    %280 = vmatprep.subr.mxu0 0.0
    %281 = vmatpush1.msra.mxu0 0.0
    %282 = vmatprep.subr.mxu0 0.0
    %283 = vmatpush1.msra.mxu0 0.0
    %284 = vmatprep.subr.mxu0 0.0
    %285 = vmatpush1.msra.mxu0 0.0
    %286 = vmatprep.subr.mxu0 0.0
    %287 = vmatpush1.msra.mxu0 0.0
    %288 = vmatprep.subr.mxu0 0.0
    %289 = vmatpush1.msra.mxu0 0.0
    %290 = vmatprep.subr.mxu0 0.0
    %291 = vmatpush1.msra.mxu0 0.0
    %292 = vmatprep.subr.mxu0 0.0
    %293 = vmatpush1.msra.mxu0 0.0
    %294 = vmatprep.subr.mxu0 0.0
    %295 = vmatpush1.msra.mxu0 0.0
    %296 = vmatprep.subr.mxu0 0.0
    %297 = vmatpush1.msra.mxu0 0.0
    %298 = vmatprep.subr.mxu0 0.0
    %299 = vmatpush1.msra.mxu0 0.0
    %300 = vmatprep.subr.mxu0 0.0
    %301 = vmatpush1.msra.mxu0 0.0
    %302 = vmatprep.subr.mxu0 0.0
    %303 = vmatpush1.msra.mxu0 0.0
    %304 = vmatprep.subr.mxu0 0.0
    %305 = vmatpush1.msra.mxu0 0.0
    %306 = vmatprep.subr.mxu0 0.0
    %307 = vmatpush1.msra.mxu0 0.0
    %308 = vmatprep.subr.mxu0 0.0
    %309 = vmatpush1.msra.mxu0 0.0
    %310 = vmatprep.subr.mxu0 0.0
    %311 = vmatpush1.msra.mxu0 0.0
    %312 = vmatprep.mubr.f32.mxu0 0.0
    %313 = vmatmul.mubr.f32.gmra.mrb[0].mxu0 %v246
    %v314 = vpop.f32.mrb[0].mxu0
    %v315 = vadd.f32 0.0, %v314
    %v316 = vpop.f32.mrb[0].mxu0
    %317 = vdwg.mxu0
    %v319 = vsel %vm220, %v242, 0
    %321 = vmatprep.subr.mxu0 0.0
    %322 = vmatpush1.msra.mxu0 %v66
    %323 = vmatprep.subr.mxu0 0.0
    %324 = vmatpush1.msra.mxu0 0.0
    %325 = vmatprep.subr.mxu0 0.0
    %326 = vmatpush1.msra.mxu0 0.0
    %327 = vmatprep.subr.mxu0 0.0
    %328 = vmatpush1.msra.mxu0 0.0
    %329 = vmatprep.subr.mxu0 0.0
    %330 = vmatpush1.msra.mxu0 0.0
    %331 = vmatprep.subr.mxu0 0.0
    %332 = vmatpush1.msra.mxu0 0.0
    %333 = vmatprep.subr.mxu0 0.0
    %334 = vmatpush1.msra.mxu0 0.0
    %335 = vmatprep.subr.mxu0 0.0
    %336 = vmatpush1.msra.mxu0 0.0
    %337 = vmatprep.subr.mxu0 0.0
    %338 = vmatpush1.msra.mxu0 0.0
    %339 = vmatprep.subr.mxu0 0.0
    %340 = vmatpush1.msra.mxu0 0.0
    %341 = vmatprep.subr.mxu0 0.0
    %342 = vmatpush1.msra.mxu0 0.0
    %343 = vmatprep.subr.mxu0 0.0
    %344 = vmatpush1.msra.mxu0 0.0
    %345 = vmatprep.subr.mxu0 0.0
    %346 = vmatpush1.msra.mxu0 0.0
    %347 = vmatprep.subr.mxu0 0.0
    %348 = vmatpush1.msra.mxu0 0.0
    %349 = vmatprep.subr.mxu0 0.0
    %350 = vmatpush1.msra.mxu0 0.0
    %351 = vmatprep.subr.mxu0 0.0
    %352 = vmatpush1.msra.mxu0 0.0
    %353 = vmatprep.subr.mxu0 0.0
    %354 = vmatpush1.msra.mxu0 0.0
    %355 = vmatprep.subr.mxu0 0.0
    %356 = vmatpush1.msra.mxu0 0.0
    %357 = vmatprep.subr.mxu0 0.0
    %358 = vmatpush1.msra.mxu0 0.0
    %359 = vmatprep.subr.mxu0 0.0
    %360 = vmatpush1.msra.mxu0 0.0
    %361 = vmatprep.subr.mxu0 0.0
    %362 = vmatpush1.msra.mxu0 0.0
    %363 = vmatprep.subr.mxu0 0.0
    %364 = vmatpush1.msra.mxu0 0.0
    %365 = vmatprep.subr.mxu0 0.0
    %366 = vmatpush1.msra.mxu0 0.0
    %367 = vmatprep.subr.mxu0 0.0
    %368 = vmatpush1.msra.mxu0 0.0
    %369 = vmatprep.subr.mxu0 0.0
    %370 = vmatpush1.msra.mxu0 0.0
    %371 = vmatprep.subr.mxu0 0.0
    %372 = vmatpush1.msra.mxu0 0.0
    %373 = vmatprep.subr.mxu0 0.0
    %374 = vmatpush1.msra.mxu0 0.0
    %375 = vmatprep.subr.mxu0 0.0
    %376 = vmatpush1.msra.mxu0 0.0
    %377 = vmatprep.subr.mxu0 0.0
    %378 = vmatpush1.msra.mxu0 0.0
    %379 = vmatprep.subr.mxu0 0.0
    %380 = vmatpush1.msra.mxu0 0.0
    %381 = vmatprep.subr.mxu0 0.0
    %382 = vmatpush1.msra.mxu0 0.0
    %383 = vmatprep.subr.mxu0 0.0
    %384 = vmatpush1.msra.mxu0 0.0
    %385 = vmatprep.mubr.f32.mxu0 0.0
    %386 = vmatmul.mubr.f32.gmra.mrb[0].mxu0 %v319
    %v387 = vpop.f32.mrb[0].mxu0
    %v388 = vadd.f32 0.0, %v387
    %v389 = vpop.f32.mrb[0].mxu0
    %390 = vdwg.mxu0
    %391 = vst.msk [vmem:[#allocation8] sm:$0xff] %vm67, %v315
    %392 = vst.msk [vmem:[#allocation8 + $0x8] sm:$0xff] %vm67, %v388
    // Predicated region
    $region26: #{tpu_custom_call.1} parent=1 // pred_check
      _
    $region27: #{tpu_custom_call.1} parent=1 // pred_check_branch
      %394 = sbr.rel (0) target = $region29
    $region28: #{tpu_custom_call.1} parent=1 // pred_region
      %s396 = ssub.s32 256, 256
      %397 = vsyncadd [#allocation4], %s396
      %s398 = sshll.u32 [#allocation8], 4
      %s399 = int_to_ptr.vmem [resolvable:$true] %s398
      %404 = dma.vmem_to_hbm [thread:$0]  %s399, 256, %s3, [#allocation4], 128, 128, 8
    $region29: #{tpu_custom_call.1} parent=1 // pred_fallthru
      _
    // Predicated region
    $region30: #{tpu_custom_call.1} parent=1 // pred_check
      _
    $region31: #{tpu_custom_call.1} parent=1 // pred_check_branch
      %406 = sbr.rel (0) target = $region33
    $region32: #{tpu_custom_call.1} parent=1 // pred_region
      %s408 = ssub.s32 256, 256
      %409 = vsyncadd [#allocation10], %s408
      %s410 = sshll.u32 [#allocation9], 4
      %s411 = int_to_ptr.vmem [resolvable:$true] %s410
      %416 = dma.vmem_to_hbm [thread:$0]  %s411, 256, %s4, [#allocation10], 128, 128, 8
    $region33: #{tpu_custom_call.1} parent=1 // pred_fallthru
      _
    // Predicated region
    $region34: #{tpu_custom_call.1} parent=1 // pred_check
      _
    $region35: #{tpu_custom_call.1} parent=1 // pred_check_branch
      %418 = sbr.rel (0) target = $region37
    $region36: #{tpu_custom_call.1} parent=1 // pred_region
      %419 = dma.done [#allocation4], 256
    $region37: #{tpu_custom_call.1} parent=1 // pred_fallthru
      _
    // Predicated region
    $region38: #{tpu_custom_call.1} parent=1 // pred_check
      _
    $region39: #{tpu_custom_call.1} parent=1 // pred_check_branch
      %421 = sbr.rel (0) target = $region41
    $region40: #{tpu_custom_call.1} parent=1 // pred_region
      %422 = dma.done [#allocation10], 256
    $region41: #{tpu_custom_call.1} parent=1 // pred_fallthru
      _
    %423 = vsyncpa [#allocation3], 1
    %424 = vsyncpa [#allocation6], 1
    %425 = vsyncpa [#allocation4], 1
    %426 = vsyncpa [#allocation10], 1

</llo_original>
